<compile_context>
chip_gen: v7x
topology: tpu7x:2x2x1
jax: 0.10.0
libtpu: 0.0.40
codegen_flags: <defaults>
</compile_context>

<pallas_src>
import functools

import jax
import jax.numpy as jnp
from jax import lax
from jax.experimental import pallas as pl
from jax.experimental.pallas import tpu as pltpu


def _head_attn_kernel(x_ref, wqkv_ref, o_ref, *, scale, hp):
    # x_ref    : (bb, T, C)    bf16 input block (bb batches per grid step)
    # wqkv_ref : (C, 3*Hp)     fused, zero-padded [Wq | Wk | Wv], bf16
    # o_ref    : (bb, T, Hp)   lane-dense (padded) output
    T = x_ref.shape[1]

    x = x_ref[...]                                   # (bb, T, C)  bf16
    w = wqkv_ref[...]                                # (C, 3*Hp)   bf16

    # Fused QKV projection: one MXU matmul over all bb*T rows, f32 accumulation.
    qkv = lax.dot_general(
        x, w, dimension_numbers=(((2,), (0,)), ((), ())),
        preferred_element_type=jnp.float32)          # (bb, T, 3*Hp) f32

    # 128-lane-aligned slices (offsets 0 / Hp / 2*Hp) -> free views, no relayout.
    # The 1/sqrt(head_size) scale is folded into q (bb*T*Hp multiplies, not T*T).
    q = (qkv[..., 0 * hp:1 * hp] * scale).astype(jnp.bfloat16)   # (bb, T, Hp)
    k = qkv[..., 1 * hp:2 * hp].astype(jnp.bfloat16)             # (bb, T, Hp)
    v = qkv[..., 2 * hp:3 * hp].astype(jnp.bfloat16)             # (bb, T, Hp)

    # scores = q @ k^T per batch; contract last dims of both (no transposed temporary).
    scores = jnp.einsum("btd,bsd->bts", q, k,
                        preferred_element_type=jnp.float32)      # (bb, T, T) f32

    # Causal mask generated in-kernel (no DMA'd (T,T) bias array).
    row = lax.broadcasted_iota(jnp.int32, (T, T), 0)
    col = lax.broadcasted_iota(jnp.int32, (T, T), 1)
    wei = jnp.where((col <= row)[None, :, :], scores, jnp.float32(-1e30))

    # Numerically-stable softmax; all statistics in f32 (VPU/EUP).
    m = jnp.max(wei, axis=-1, keepdims=True)                     # (bb, T, 1)
    p = jnp.exp(wei - m)                                         # (bb, T, T)
    denom = jnp.sum(p, axis=-1, keepdims=True)                   # (bb, T, 1)

    # TODO(synk): attention-weight dropout (p=0.2) would apply here; identity at inference.

    # (p @ v) on the MXU in bf16 with f32 accumulation; normalize once on the small side.
    pv = jnp.einsum("bts,bsd->btd", p.astype(jnp.bfloat16), v,
                    preferred_element_type=jnp.float32)          # (bb, T, Hp) f32

    # Exact normalization (approx=True saves ~nothing here and adds ~1e-3 rel error).
    o_ref[...] = (pv * pl.reciprocal(denom, approx=False)).astype(o_ref.dtype)


def head_attention(x, wq, wk, wv, block_size=None, batch_block=None, out_dtype=None):
    """Single attention head matching PyTorch `Head.forward` (dropout = identity).

    x          : (B, T, C)
    wq, wk, wv : (C, H)   projection weights in (in, out) layout (y = x @ W)
    returns    : (B, T, H)
    """
    B, T, C = x.shape
    H = wq.shape[-1]
    if block_size is None:
        block_size = T
    assert block_size >= T, f"block_size ({block_size}) must be >= T ({T})"
    if batch_block is None:
        batch_block = B                      # one grid step at toy sizes
    assert B % batch_block == 0, "B must be divisible by batch_block"
    if out_dtype is None:
        out_dtype = x.dtype                  # set jnp.bfloat16 to halve writeback DMA

    LANE = 128
    hp = ((H + LANE - 1) // LANE) * LANE     # pad head dim to full lane width

    # Static weight prep (done once, outside the kernel): pad each projection to
    # (C, Hp), fuse into one lane-contiguous slab, pre-cast to bf16.
    def _pad(w):
        return jnp.pad(w, ((0, 0), (0, hp - H)))
    wqkv = jnp.concatenate([_pad(wq), _pad(wk), _pad(wv)], axis=-1).astype(jnp.bfloat16)

    # Feed x in bf16: halves the (B,T,C) HBM->VMEM DMA; softmax math stays f32 in-kernel.
    x_bf16 = x.astype(jnp.bfloat16)

    nb = B // batch_block
    kernel = functools.partial(_head_attn_kernel, scale=float(H) ** -0.5, hp=hp)

    out_padded = pl.pallas_call(
        kernel,
        out_shape=jax.ShapeDtypeStruct((B, T, hp), out_dtype),
        grid=(nb,),
        in_specs=[
            pl.BlockSpec((batch_block, T, C), lambda i: (i, 0, 0)),
            pl.BlockSpec((C, 3 * hp), lambda i: (0, 0)),
        ],
        out_specs=pl.BlockSpec((batch_block, T, hp), lambda i: (i, 0, 0)),
        compiler_params=pltpu.CompilerParams(
            dimension_semantics=("parallel",),
            # Explicit scoped-VMEM limit (v5e default is only 16 MiB) with headroom
            # for v7x's 64 MiB physical VMEM.
            vmem_limit_bytes=64 * 1024 * 1024,
        ),
    )(x_bf16, wqkv)

    # Drop the zero padding outside the kernel so the kernel's stores stay lane-dense.
    return out_padded[:, :, :H]


def _reference(x, wq, wk, wv):
    """Pure-JAX f32 reference reproducing PyTorch `Head.forward` (dropout = identity)."""
    B, T, C = x.shape
    H = wq.shape[-1]
    q = x @ wq
    k = x @ wk
    v = x @ wv
    wei = jnp.einsum("btd,bsd->bts", q, k) * (H ** -0.5)
    mask = jnp.tril(jnp.ones((T, T), dtype=bool))
    wei = jnp.where(mask[None], wei, -jnp.inf)
    wei = jax.nn.softmax(wei, axis=-1)
    return jnp.einsum("bts,bsd->btd", wei, v)


if __name__ == "__main__":
    # Small, shape-consistent config (block_size >= T, head_size = n_embd // n_heads style).
    B, T = 2, 8
    n_embd = 32
    head_size = 8
    block_size = 8

    key = jax.random.PRNGKey(0)
    kx, kq, kk, kv = jax.random.split(key, 4)

    x = jax.random.normal(kx, (B, T, n_embd), dtype=jnp.float32)
    # Weights stored as (n_embd, head_size) in (in, out) layout so y = x @ W matches
    # PyTorch's nn.Linear(n_embd, head_size, bias=False) (y = x @ W^T).
    wscale = 1.0 / jnp.sqrt(jnp.float32(n_embd))
    wq = jax.random.normal(kq, (n_embd, head_size), dtype=jnp.float32) * wscale
    wk = jax.random.normal(kk, (n_embd, head_size), dtype=jnp.float32) * wscale
    wv = jax.random.normal(kv, (n_embd, head_size), dtype=jnp.float32) * wscale

    out = head_attention(x, wq, wk, wv, block_size=block_size)
    out = jax.block_until_ready(out)

    ref = _reference(x, wq, wk, wv)
    assert out.shape == (B, T, head_size)
    max_err = float(jnp.max(jnp.abs(out - ref)))
    # bf16 MXU operands vs f32 reference => loose-but-safe tolerance.
    assert jnp.allclose(out, ref, atol=5e-2, rtol=5e-2), f"mismatch vs reference (max_err={max_err})"

    print("KERNEL_OK")
</pallas_src>

<mosaic_0001>
module attributes {stable_mosaic.version = 11 : i64} {
  func.func @_head_attn_kernel(%arg0: i32, %arg1: memref<2x8x32xbf16, #tpu.memory_space<vmem>>, %arg2: memref<32x384xbf16, #tpu.memory_space<vmem>>, %arg3: memref<2x8x128xf32, #tpu.memory_space<vmem>>) attributes {dimension_semantics = [#tpu.dimension_semantics<parallel>], iteration_bounds = array<i64: 1>, scalar_prefetch = 0 : i64, scratch_operands = 0 : i64, tpu.core_type = #tpu.core_type<tc>, window_params = [{transform_indices = @transform_0, window_bounds = array<i64: 2, 8, 32>}, {pipeline_mode = #tpu.pipeline_mode<synchronous>, transform_indices = @transform_1, window_bounds = array<i64: 32, 384>}, {transform_indices = @transform_2, window_bounds = array<i64: 2, 8, 128>}]} {
    %c0 = arith.constant 0 : index
    %c0_0 = arith.constant 0 : index
    %c0_1 = arith.constant 0 : index
    %0 = vector.load %arg1[%c0, %c0_0, %c0_1] : memref<2x8x32xbf16, #tpu.memory_space<vmem>>, vector<2x8x32xbf16>
    %c0_2 = arith.constant 0 : index
    %c0_3 = arith.constant 0 : index
    %1 = vector.load %arg2[%c0_2, %c0_3] : memref<32x384xbf16, #tpu.memory_space<vmem>>, vector<32x384xbf16>
    %cst = arith.constant dense<0.000000e+00> : vector<2x8x384xf32>
    %2 = tpu.matmul %0, %1, %cst {dimension_numbers = #tpu.dot_dimension_numbers<[2], [0], [0, 1], [1], [0, 0, 0, 1, 1, 1], [], []>} : vector<2x8x32xbf16>, vector<32x384xbf16>, vector<2x8x384xf32> -> vector<2x8x384xf32>
    %3 = vector.extract_strided_slice %2 {offsets = [0, 0, 0], sizes = [2, 8, 128], strides = [1, 1, 1]} : vector<2x8x384xf32> to vector<2x8x128xf32>
    %cst_4 = arith.constant 0.353553385 : f32
    %4 = vector.broadcast %cst_4 : f32 to vector<2x8x128xf32>
    %5 = arith.mulf %3, %4 : vector<2x8x128xf32>
    %6 = arith.truncf %5 : vector<2x8x128xf32> to vector<2x8x128xbf16>
    %7 = vector.extract_strided_slice %2 {offsets = [0, 0, 128], sizes = [2, 8, 128], strides = [1, 1, 1]} : vector<2x8x384xf32> to vector<2x8x128xf32>
    %8 = arith.truncf %7 : vector<2x8x128xf32> to vector<2x8x128xbf16>
    %9 = vector.extract_strided_slice %2 {offsets = [0, 0, 256], sizes = [2, 8, 128], strides = [1, 1, 1]} : vector<2x8x384xf32> to vector<2x8x128xf32>
    %10 = arith.truncf %9 : vector<2x8x128xf32> to vector<2x8x128xbf16>
    "tpu.trace_start"() <{level = 10 : i32, message = "btd,bsd->bts"}> : () -> ()
    %cst_5 = arith.constant dense<0.000000e+00> : vector<2x8x8xf32>
    %11 = tpu.matmul %6, %8, %cst_5 {dimension_numbers = #tpu.dot_dimension_numbers<[2], [2], [1], [1], [0, 0, 0, 1, 1, 1], [0], [0]>} : vector<2x8x128xbf16>, vector<2x8x128xbf16>, vector<2x8x8xf32> -> vector<2x8x8xf32>
    "tpu.trace_stop"() : () -> ()
    %12 = tpu.iota {dimensions = array<i32: 0>} : vector<8x8xi32>
    %13 = tpu.iota {dimensions = array<i32: 1>} : vector<8x8xi32>
    %14 = arith.cmpi sle, %13, %12 : vector<8x8xi32>
    %15 = vector.shape_cast %14 : vector<8x8xi1> to vector<1x8x8xi1>
    %cst_6 = arith.constant -1.000000e+30 : f32
    %16 = vector.shape_cast %15 : vector<1x8x8xi1> to vector<1x8x8xi1>
    %17 = vector.broadcast %16 : vector<1x8x8xi1> to vector<2x8x8xi1>
    %18 = vector.broadcast %cst_6 : f32 to vector<2x8x8xf32>
    %19 = arith.select %17, %11, %18 : vector<2x8x8xi1>, vector<2x8x8xf32>
    %cst_7 = arith.constant dense<0xFF800000> : vector<2x8xf32>
    %20 = vector.multi_reduction <maximumf>, %19, %cst_7 [2] : vector<2x8x8xf32> to vector<2x8xf32>
    %21 = vector.shape_cast %20 : vector<2x8xf32> to vector<2x8x1xf32>
    %22 = vector.broadcast %21 : vector<2x8x1xf32> to vector<2x8x8xf32>
    %23 = arith.subf %19, %22 : vector<2x8x8xf32>
    %24 = math.exp %23 : vector<2x8x8xf32>
    %cst_8 = arith.constant dense<0.000000e+00> : vector<2x8xf32>
    %25 = vector.multi_reduction <add>, %24, %cst_8 [2] : vector<2x8x8xf32> to vector<2x8xf32>
    %26 = vector.shape_cast %25 : vector<2x8xf32> to vector<2x8x1xf32>
    %27 = arith.truncf %24 : vector<2x8x8xf32> to vector<2x8x8xbf16>
    "tpu.trace_start"() <{level = 10 : i32, message = "bts,bsd->btd"}> : () -> ()
    %cst_9 = arith.constant dense<0.000000e+00> : vector<2x8x128xf32>
    %28 = tpu.matmul %27, %10, %cst_9 {dimension_numbers = #tpu.dot_dimension_numbers<[2], [1], [1], [2], [0, 0, 0, 1, 1, 2], [0], [0]>} : vector<2x8x8xbf16>, vector<2x8x128xbf16>, vector<2x8x128xf32> -> vector<2x8x128xf32>
    "tpu.trace_stop"() : () -> ()
    %29 = tpu.reciprocal %26 : vector<2x8x1xf32> -> vector<2x8x1xf32>
    %30 = vector.broadcast %29 : vector<2x8x1xf32> to vector<2x8x128xf32>
    %31 = arith.mulf %28, %30 : vector<2x8x128xf32>
    %c0_10 = arith.constant 0 : index
    %c0_11 = arith.constant 0 : index
    %c0_12 = arith.constant 0 : index
    %32 = vector.load %arg3[%c0_10, %c0_11, %c0_12] : memref<2x8x128xf32, #tpu.memory_space<vmem>>, vector<2x8x128xf32>
    tpu.vector_store %arg3[%c0_10, %c0_11, %c0_12], %31 {strides = array<i32>} : memref<2x8x128xf32, #tpu.memory_space<vmem>>, vector<2x8x128xf32>,
    return
  }
  func.func @transform_0(%arg0: i32) -> (i32, i32, i32) {
    %c0_i32 = arith.constant 0 : i32
    %c0_i32_0 = arith.constant 0 : i32
    %c0_i32_1 = arith.constant 0 : i32
    return %arg0, %c0_i32, %c0_i32_0 : i32, i32, i32
  }
  func.func @transform_1(%arg0: i32) -> (i32, i32) {
    %c0_i32 = arith.constant 0 : i32
    %c0_i32_0 = arith.constant 0 : i32
    %c0_i32_1 = arith.constant 0 : i32
    return %c0_i32, %c0_i32_0 : i32, i32
  }
  func.func @transform_2(%arg0: i32) -> (i32, i32, i32) {
    %c0_i32 = arith.constant 0 : i32
    %c0_i32_0 = arith.constant 0 : i32
    %c0_i32_1 = arith.constant 0 : i32
    return %arg0, %c0_i32, %c0_i32_0 : i32, i32, i32
  }
}

</mosaic_0001>

<llo_original>
// kernel: tpu_custom_call.1
$region0: #{tpu_custom_call.1}
  #allocation0 [shape = 'u32[]', space=smem, size = 0x4, offset = 0x4, fixed_abs, tag = 'smem constant byte address 0x4 - core index']
  #allocation1 [shape = 'u32[144,128]{1,0:T(1,128)}', space=vmem, size = 0x12000, scoped, tag = 'internal scratch']
  %s0 = inlined_call_operand.hbm [shape: bf16[2,8,32], index: 0, kind: input, shape index: {}]
  %s1 = inlined_call_operand.hbm [shape: bf16[32,384], index: 1, kind: input, shape index: {}]
  %s2 = inlined_call_operand.hbm [shape: f32[2,8,128], index: 2, kind: output, shape index: {}]
  %s3 = sld [smem:[#allocation0]]
  $region26: #{tpu_custom_call.1} parent=0
    _
  %s5 = ssub.s32 1, %s3
  %s6 = scalar_select 0, %s5, %s3
  $region1: #{tpu_custom_call.1} parent=0
    #allocation2 [shape = 'u8[4096]{0}', space=vmem, size = 0x1000, scoped, tag = 'input window, operand 0, single buffered']
    #allocation3 [shape = 's32[1]{0}', space=sflag, size = 0x4, scoped, tag = 'scoped memory for tpu_custom_call.1']
    #allocation4 [shape = 's32[1]{0}', space=sflag, size = 0x4, scoped, tag = 'scoped memory for tpu_custom_call.1']
    #allocation5 [shape = 'u8[24576]{0}', space=vmem, size = 0x6000, scoped, tag = 'input window, operand 1, single buffered']
    #allocation6 [shape = 's32[1]{0}', space=sflag, size = 0x4, scoped, tag = 'scoped memory for tpu_custom_call.1']
    #allocation7 [shape = 'u8[8192]{0}', space=vmem, size = 0x2000, scoped, tag = 'output window, operand 0, single buffered']
    %7 = vsyncpa [#allocation3], 0
    %8 = vsyncpa [#allocation6], 0
    %9 = vsyncpa [#allocation4], 0
    // Predicated region
    $region2: #{tpu_custom_call.1} parent=1 // pred_check
      _
    $region3: #{tpu_custom_call.1} parent=1 // pred_check_branch
      %11 = sbr.rel (0) target = $region5
    $region4: #{tpu_custom_call.1} parent=1 // pred_region
      %s13 = ssub.s32 128, 128
      %14 = vsyncadd [#allocation3], %s13
      %s15 = sshll.u32 [#allocation2], 4
      %s16 = int_to_ptr.vmem [resolvable:$true] %s15
      %21 = dma.hbm_to_vmem [thread:$0]  %s0, 128, %s16, [#allocation3], 64, 64, 4
    $region5: #{tpu_custom_call.1} parent=1 // pred_fallthru
      _
    // Predicated region
    $region6: #{tpu_custom_call.1} parent=1 // pred_check
      _
    $region7: #{tpu_custom_call.1} parent=1 // pred_check_branch
      %23 = sbr.rel (0) target = $region9
    $region8: #{tpu_custom_call.1} parent=1 // pred_region
      %s25 = ssub.s32 768, 768
      %26 = vsyncadd [#allocation6], %s25
      %s27 = sshll.u32 [#allocation5], 4
      %s28 = int_to_ptr.vmem [resolvable:$true] %s27
      %33 = dma.hbm_to_vmem [thread:$0]  %s1, 768, %s28, [#allocation6], 192, 192, 12
    $region9: #{tpu_custom_call.1} parent=1 // pred_fallthru
      _
    // Predicated region
    $region10: #{tpu_custom_call.1} parent=1 // pred_check
      _
    $region11: #{tpu_custom_call.1} parent=1 // pred_check_branch
      %35 = sbr.rel (0) target = $region13
    $region12: #{tpu_custom_call.1} parent=1 // pred_region
      %36 = dma.done [#allocation3], 128
    $region13: #{tpu_custom_call.1} parent=1 // pred_fallthru
      _
    // Predicated region
    $region14: #{tpu_custom_call.1} parent=1 // pred_check
      _
    $region15: #{tpu_custom_call.1} parent=1 // pred_check_branch
      %38 = sbr.rel (0) target = $region17
    $region16: #{tpu_custom_call.1} parent=1 // pred_region
      %39 = dma.done [#allocation6], 768
    $region17: #{tpu_custom_call.1} parent=1 // pred_fallthru
      _
    %v41 = vld [vmem:[#allocation2] sm:$0xf]
    %v42 = vld [vmem:[#allocation2 + $0x4] sm:$0xf]
    %v43 = vld [vmem:[#allocation5] sm:$0xff]
    %v44 = vld [vmem:[#allocation5 + $0x8] sm:$0xf]
    %v45 = vld [vmem:[#allocation5 + $0xc] sm:$0xff]
    %v46 = vld [vmem:[#allocation5 + $0x14] sm:$0xf]
    %v47 = vld [vmem:[#allocation5 + $0x18] sm:$0xff]
    %v48 = vld [vmem:[#allocation5 + $0x20] sm:$0xf]
    %v49 = vld [vmem:[#allocation5 + $0x24] sm:$0xff]
    %v50 = vld [vmem:[#allocation5 + $0x2c] sm:$0xf]
    %v53 = vunpack.c.l.b16 %v41
    %v54 = vunpack.c.l.b16 %v42
    %v55 = vpack.c.b16 %v54, %v53
    %v64 = vunpack.c.l.b16 %v43
    %v65 = vunpack.c.h.b16 %v43
    %v66 = vunpack.c.l.b16 %v44
    %v67 = vunpack.c.l.b16 %v45
    %v68 = vunpack.c.h.b16 %v45
    %v69 = vunpack.c.l.b16 %v46
    %v70 = vunpack.c.l.b16 %v47
    %v71 = vunpack.c.h.b16 %v47
    %v72 = vunpack.c.l.b16 %v48
    %v73 = vunpack.c.l.b16 %v49
    %v74 = vunpack.c.h.b16 %v49
    %v75 = vunpack.c.l.b16 %v50
    %v76 = vpack.c.b16 %v67, %v64
    %v77 = vpack.c.b16 %v68, %v65
    %v78 = vpack.c.b16 %v69, %v66
    %v79 = vpack.c.b16 %v73, %v70
    %v80 = vpack.c.b16 %v74, %v71
    %v81 = vpack.c.b16 %v75, %v72
    %vm88 = vcmask 261120
    %v90 = vsel %vm88, %v55, 0
    %92 = vmatprep.subr.bf16.mxu0 %v77
    %93 = vmatpush1.bf16.msra.mxu0 %v76
    %94 = vmatprep.subr.bf16.mxu0 %v80
    %95 = vmatpush1.bf16.msra.mxu0 %v79
    %96 = vmatprep.subr.bf16.mxu0 0
    %97 = vmatpush1.bf16.msra.mxu0 0
    %98 = vmatprep.subr.bf16.mxu0 0
    %99 = vmatpush1.bf16.msra.mxu0 0
    %100 = vmatprep.subr.bf16.mxu0 0
    %101 = vmatpush1.bf16.msra.mxu0 0
    %102 = vmatprep.subr.bf16.mxu0 0
    %103 = vmatpush1.bf16.msra.mxu0 0
    %104 = vmatprep.subr.bf16.mxu0 0
    %105 = vmatpush1.bf16.msra.mxu0 0
    %106 = vmatprep.subr.bf16.mxu0 0
    %107 = vmatpush1.bf16.msra.mxu0 0
    %108 = vmatprep.subr.bf16.mxu0 0
    %109 = vmatpush1.bf16.msra.mxu0 0
    %110 = vmatprep.subr.bf16.mxu0 0
    %111 = vmatpush1.bf16.msra.mxu0 0
    %112 = vmatprep.subr.bf16.mxu0 0
    %113 = vmatpush1.bf16.msra.mxu0 0
    %114 = vmatprep.subr.bf16.mxu0 0
    %115 = vmatpush1.bf16.msra.mxu0 0
    %116 = vmatprep.subr.bf16.mxu0 0
    %117 = vmatpush1.bf16.msra.mxu0 0
    %118 = vmatprep.subr.bf16.mxu0 0
    %119 = vmatpush1.bf16.msra.mxu0 0
    %120 = vmatprep.subr.bf16.mxu0 0
    %121 = vmatpush1.bf16.msra.mxu0 0
    %122 = vmatprep.subr.bf16.mxu0 0
    %123 = vmatpush1.bf16.msra.mxu0 0
    %124 = vmatprep.mubr.bf16.mxu0 0
    %125 = vmatmul.mubr.bf16.gmra.mrb[0].mxu0 %v90
    %v126 = vpop.f32.mrb[0].mxu0
    %v127 = vadd.f32 0.0, %v126
    %v128 = vpop.f32.mrb[0].mxu0
    %v129 = vadd.f32 0.0, %v128
    %v130 = vpop.f32.mrb[0].mxu0
    %v131 = vadd.f32 0.0, %v130
    %v132 = vpop.f32.mrb[0].mxu0
    %v133 = vadd.f32 0.0, %v132
    %134 = vdwg.mxu0
    %135 = vmatprep.subr.bf16.mxu0 0
    %136 = vmatpush1.bf16.msra.mxu0 %v78
    %137 = vmatprep.subr.bf16.mxu0 0
    %138 = vmatpush1.bf16.msra.mxu0 %v81
    %139 = vmatprep.subr.bf16.mxu0 0
    %140 = vmatpush1.bf16.msra.mxu0 0
    %141 = vmatprep.subr.bf16.mxu0 0
    %142 = vmatpush1.bf16.msra.mxu0 0
    %143 = vmatprep.subr.bf16.mxu0 0
    %144 = vmatpush1.bf16.msra.mxu0 0
    %145 = vmatprep.subr.bf16.mxu0 0
    %146 = vmatpush1.bf16.msra.mxu0 0
    %147 = vmatprep.subr.bf16.mxu0 0
    %148 = vmatpush1.bf16.msra.mxu0 0
    %149 = vmatprep.subr.bf16.mxu0 0
    %150 = vmatpush1.bf16.msra.mxu0 0
    %151 = vmatprep.subr.bf16.mxu0 0
    %152 = vmatpush1.bf16.msra.mxu0 0
    %153 = vmatprep.subr.bf16.mxu0 0
    %154 = vmatpush1.bf16.msra.mxu0 0
    %155 = vmatprep.subr.bf16.mxu0 0
    %156 = vmatpush1.bf16.msra.mxu0 0
    %157 = vmatprep.subr.bf16.mxu0 0
    %158 = vmatpush1.bf16.msra.mxu0 0
    %159 = vmatprep.subr.bf16.mxu0 0
    %160 = vmatpush1.bf16.msra.mxu0 0
    %161 = vmatprep.subr.bf16.mxu0 0
    %162 = vmatpush1.bf16.msra.mxu0 0
    %163 = vmatprep.subr.bf16.mxu0 0
    %164 = vmatpush1.bf16.msra.mxu0 0
    %165 = vmatprep.subr.bf16.mxu0 0
    %166 = vmatpush1.bf16.msra.mxu0 0
    %167 = vmatprep.mubr.bf16.mxu0 0
    %168 = vmatmul.mubr.bf16.gmra.mrb[0].mxu0 %v90
    %v169 = vpop.f32.mrb[0].mxu0
    %v170 = vadd.f32 0.0, %v169
    %v171 = vpop.f32.mrb[0].mxu0
    %v172 = vpop.f32.mrb[0].mxu0
    %v173 = vadd.f32 0.0, %v172
    %v174 = vpop.f32.mrb[0].mxu0
    %175 = vdwg.mxu0
    %v176 = vmul.f32 %v127, 0.35355338
    %v177 = vmul.f32 %v131, 0.35355338
    %v178 = vpack.c.bf16 %v176, %v176
    %v179 = vpack.c.bf16 %v177, %v177
    %v180 = vpack.c.bf16 %v129, %v129
    %v181 = vpack.c.bf16 %v133, %v133
    %v182 = vpack.c.bf16 %v170, %v170
    %v183 = vpack.c.bf16 %v173, %v173
    %184 = vmatprep.subr.bf16.mxu0 0
    %185 = vmatpush1.bf16.xpose.msra.mxu0 %v180
    %186 = vmatprep.subr.bf16.mxu0 0
    %187 = vmatpush1.bf16.xpose.msra.mxu0 0
    %188 = vmatprep.subr.bf16.mxu0 0
    %189 = vmatpush1.bf16.xpose.msra.mxu0 0
    %190 = vmatprep.subr.bf16.mxu0 0
    %191 = vmatpush1.bf16.xpose.msra.mxu0 0
    %192 = vmatprep.subr.bf16.mxu0 0
    %193 = vmatpush1.bf16.xpose.msra.mxu0 0
    %194 = vmatprep.subr.bf16.mxu0 0
    %195 = vmatpush1.bf16.xpose.msra.mxu0 0
    %196 = vmatprep.subr.bf16.mxu0 0
    %197 = vmatpush1.bf16.xpose.msra.mxu0 0
    %198 = vmatprep.subr.bf16.mxu0 0
    %199 = vmatpush1.bf16.xpose.msra.mxu0 0
    %200 = vmatprep.subr.bf16.mxu0 0
    %201 = vmatpush1.bf16.xpose.msra.mxu0 0
    %202 = vmatprep.subr.bf16.mxu0 0
    %203 = vmatpush1.bf16.xpose.msra.mxu0 0
    %204 = vmatprep.subr.bf16.mxu0 0
    %205 = vmatpush1.bf16.xpose.msra.mxu0 0
    %206 = vmatprep.subr.bf16.mxu0 0
    %207 = vmatpush1.bf16.xpose.msra.mxu0 0
    %208 = vmatprep.subr.bf16.mxu0 0
    %209 = vmatpush1.bf16.xpose.msra.mxu0 0
    %210 = vmatprep.subr.bf16.mxu0 0
    %211 = vmatpush1.bf16.xpose.msra.mxu0 0
    %212 = vmatprep.subr.bf16.mxu0 0
    %213 = vmatpush1.bf16.xpose.msra.mxu0 0
    %214 = vmatprep.subr.bf16.mxu0 0
    %215 = vmatpush1.bf16.xpose.msra.mxu0 0
    %216 = vmatprep.mubr.bf16.mxu0 0
    %217 = vmatmul.mubr.bf16.gmra.mrb[0].mxu0 %v178
    %v218 = vpop.f32.mrb[0].mxu0
    %v219 = vadd.f32 0.0, %v218
    %v220 = vpop.f32.mrb[0].mxu0
    %v221 = vpop.f32.mrb[0].mxu0
    %v222 = vpop.f32.mrb[0].mxu0
    %223 = vdwg.mxu0
    %224 = vmatprep.subr.bf16.mxu0 0
    %225 = vmatpush1.bf16.xpose.msra.mxu0 %v181
    %226 = vmatprep.subr.bf16.mxu0 0
    %227 = vmatpush1.bf16.xpose.msra.mxu0 0
    %228 = vmatprep.subr.bf16.mxu0 0
    %229 = vmatpush1.bf16.xpose.msra.mxu0 0
    %230 = vmatprep.subr.bf16.mxu0 0
    %231 = vmatpush1.bf16.xpose.msra.mxu0 0
    %232 = vmatprep.subr.bf16.mxu0 0
    %233 = vmatpush1.bf16.xpose.msra.mxu0 0
    %234 = vmatprep.subr.bf16.mxu0 0
    %235 = vmatpush1.bf16.xpose.msra.mxu0 0
    %236 = vmatprep.subr.bf16.mxu0 0
    %237 = vmatpush1.bf16.xpose.msra.mxu0 0
    %238 = vmatprep.subr.bf16.mxu0 0
    %239 = vmatpush1.bf16.xpose.msra.mxu0 0
    %240 = vmatprep.subr.bf16.mxu0 0
    %241 = vmatpush1.bf16.xpose.msra.mxu0 0
    %242 = vmatprep.subr.bf16.mxu0 0
    %243 = vmatpush1.bf16.xpose.msra.mxu0 0
    %244 = vmatprep.subr.bf16.mxu0 0
    %245 = vmatpush1.bf16.xpose.msra.mxu0 0
    %246 = vmatprep.subr.bf16.mxu0 0
    %247 = vmatpush1.bf16.xpose.msra.mxu0 0
    %248 = vmatprep.subr.bf16.mxu0 0
    %249 = vmatpush1.bf16.xpose.msra.mxu0 0
    %250 = vmatprep.subr.bf16.mxu0 0
    %251 = vmatpush1.bf16.xpose.msra.mxu0 0
    %252 = vmatprep.subr.bf16.mxu0 0
    %253 = vmatpush1.bf16.xpose.msra.mxu0 0
    %254 = vmatprep.subr.bf16.mxu0 0
    %255 = vmatpush1.bf16.xpose.msra.mxu0 0
    %256 = vmatprep.mubr.bf16.mxu0 0
    %257 = vmatmul.mubr.bf16.gmra.mrb[0].mxu0 %v179
    %v258 = vpop.f32.mrb[0].mxu0
    %v259 = vadd.f32 0.0, %v258
    %v260 = vpop.f32.mrb[0].mxu0
    %v261 = vpop.f32.mrb[0].mxu0
    %v262 = vpop.f32.mrb[0].mxu0
    %263 = vdwg.mxu0
    %v264 = vlaneseq
    %v265 = vshrl.u32 %v264, 7
    %v266 = vlaneseq
    %v267 = vand.u32 %v266, 127
    %vm268 = vcmp.le.s32.totalorder %v267, %v265
    %v269 = vsel %vm268, 1, 0
    %vm270 = vcmp.eq.s32.totalorder %v269, 1
    %v271 = vsel %vm270, %v219, -1e+30
    %v272 = vsel %vm270, %v259, -1e+30
    %vm273 = vcmask 64512
    %v274 = vsel %vm273, %v271, -inf
    %275 = vmax.xlane.f32.xlu0 %v274
    %v276 = vpop.xlane.xlu0 %275
    %v277 = vsel %vm273, %v272, -inf
    %278 = vmax.xlane.f32.xlu0 %v277
    %v279 = vpop.xlane.xlu0 %278
    %v280 = vsub.f32 %v271, %v276
    %v281 = vsub.f32 %v272, %v279
    %v282 = vmul.f32 %v280, 1.442695
    %v283 = vpow.pop %v282
    %v284 = vmul.f32 %v281, 1.442695
    %v285 = vpow.pop %v284
    %v286 = vsel %vm273, %v283, 0.0
    %287 = vadd.xlane.f32.xlu0 %v286
    %v288 = vpop.xlane.xlu0 %287
    %v289 = vsel %vm273, %v285, 0.0
    %290 = vadd.xlane.f32.xlu0 %v289
    %v291 = vpop.xlane.xlu0 %290
    %v292 = vpack.c.bf16 %v283, %v283
    %v293 = vpack.c.bf16 %v285, %v285
    %v295 = vsel %vm273, %v292, 0
    %vm297 = vcmask 1043456
    %v299 = vsel %vm297, %v182, 0
    %301 = vmatprep.subr.bf16.mxu0 0
    %302 = vmatpush1.bf16.msra.mxu0 %v299
    %303 = vmatprep.subr.bf16.mxu0 0
    %304 = vmatpush1.bf16.msra.mxu0 0
    %305 = vmatprep.subr.bf16.mxu0 0
    %306 = vmatpush1.bf16.msra.mxu0 0
    %307 = vmatprep.subr.bf16.mxu0 0
    %308 = vmatpush1.bf16.msra.mxu0 0
    %309 = vmatprep.subr.bf16.mxu0 0
    %310 = vmatpush1.bf16.msra.mxu0 0
    %311 = vmatprep.subr.bf16.mxu0 0
    %312 = vmatpush1.bf16.msra.mxu0 0
    %313 = vmatprep.subr.bf16.mxu0 0
    %314 = vmatpush1.bf16.msra.mxu0 0
    %315 = vmatprep.subr.bf16.mxu0 0
    %316 = vmatpush1.bf16.msra.mxu0 0
    %317 = vmatprep.subr.bf16.mxu0 0
    %318 = vmatpush1.bf16.msra.mxu0 0
    %319 = vmatprep.subr.bf16.mxu0 0
    %320 = vmatpush1.bf16.msra.mxu0 0
    %321 = vmatprep.subr.bf16.mxu0 0
    %322 = vmatpush1.bf16.msra.mxu0 0
    %323 = vmatprep.subr.bf16.mxu0 0
    %324 = vmatpush1.bf16.msra.mxu0 0
    %325 = vmatprep.subr.bf16.mxu0 0
    %326 = vmatpush1.bf16.msra.mxu0 0
    %327 = vmatprep.subr.bf16.mxu0 0
    %328 = vmatpush1.bf16.msra.mxu0 0
    %329 = vmatprep.subr.bf16.mxu0 0
    %330 = vmatpush1.bf16.msra.mxu0 0
    %331 = vmatprep.subr.bf16.mxu0 0
    %332 = vmatpush1.bf16.msra.mxu0 0
    %333 = vmatprep.mubr.bf16.mxu0 0
    %334 = vmatmul.mubr.bf16.gmra.mrb[0].mxu0 %v295
    %v335 = vpop.f32.mrb[0].mxu0
    %v336 = vadd.f32 0.0, %v335
    %v337 = vpop.f32.mrb[0].mxu0
    %v338 = vpop.f32.mrb[0].mxu0
    %v339 = vpop.f32.mrb[0].mxu0
    %340 = vdwg.mxu0
    %v342 = vsel %vm273, %v293, 0
    %v345 = vsel %vm297, %v183, 0
    %347 = vmatprep.subr.bf16.mxu0 0
    %348 = vmatpush1.bf16.msra.mxu0 %v345
    %349 = vmatprep.subr.bf16.mxu0 0
    %350 = vmatpush1.bf16.msra.mxu0 0
    %351 = vmatprep.subr.bf16.mxu0 0
    %352 = vmatpush1.bf16.msra.mxu0 0
    %353 = vmatprep.subr.bf16.mxu0 0
    %354 = vmatpush1.bf16.msra.mxu0 0
    %355 = vmatprep.subr.bf16.mxu0 0
    %356 = vmatpush1.bf16.msra.mxu0 0
    %357 = vmatprep.subr.bf16.mxu0 0
    %358 = vmatpush1.bf16.msra.mxu0 0
    %359 = vmatprep.subr.bf16.mxu0 0
    %360 = vmatpush1.bf16.msra.mxu0 0
    %361 = vmatprep.subr.bf16.mxu0 0
    %362 = vmatpush1.bf16.msra.mxu0 0
    %363 = vmatprep.subr.bf16.mxu0 0
    %364 = vmatpush1.bf16.msra.mxu0 0
    %365 = vmatprep.subr.bf16.mxu0 0
    %366 = vmatpush1.bf16.msra.mxu0 0
    %367 = vmatprep.subr.bf16.mxu0 0
    %368 = vmatpush1.bf16.msra.mxu0 0
    %369 = vmatprep.subr.bf16.mxu0 0
    %370 = vmatpush1.bf16.msra.mxu0 0
    %371 = vmatprep.subr.bf16.mxu0 0
    %372 = vmatpush1.bf16.msra.mxu0 0
    %373 = vmatprep.subr.bf16.mxu0 0
    %374 = vmatpush1.bf16.msra.mxu0 0
    %375 = vmatprep.subr.bf16.mxu0 0
    %376 = vmatpush1.bf16.msra.mxu0 0
    %377 = vmatprep.subr.bf16.mxu0 0
    %378 = vmatpush1.bf16.msra.mxu0 0
    %379 = vmatprep.mubr.bf16.mxu0 0
    %380 = vmatmul.mubr.bf16.gmra.mrb[0].mxu0 %v342
    %v381 = vpop.f32.mrb[0].mxu0
    %v382 = vadd.f32 0.0, %v381
    %v383 = vpop.f32.mrb[0].mxu0
    %v384 = vpop.f32.mrb[0].mxu0
    %v385 = vpop.f32.mrb[0].mxu0
    %386 = vdwg.mxu0
    %v387 = vrcp.pop %v288
    %v388 = vrcp.pop %v291
    %v389 = vmul.f32 %v336, %v387
    %v390 = vmul.f32 %v382, %v388
    %391 = vst [vmem:[#allocation7] sm:$0xff] %v389
    %392 = vst [vmem:[#allocation7 + $0x8] sm:$0xff] %v390
    // Predicated region
    $region18: #{tpu_custom_call.1} parent=1 // pred_check
      _
    $region19: #{tpu_custom_call.1} parent=1 // pred_check_branch
      %394 = sbr.rel (0) target = $region21
    $region20: #{tpu_custom_call.1} parent=1 // pred_region
      %s396 = ssub.s32 256, 256
      %397 = vsyncadd [#allocation4], %s396
      %s398 = sshll.u32 [#allocation7], 4
      %s399 = int_to_ptr.vmem [resolvable:$true] %s398
      %404 = dma.vmem_to_hbm [thread:$0]  %s399, 256, %s2, [#allocation4], 128, 128, 8
    $region21: #{tpu_custom_call.1} parent=1 // pred_fallthru
      _
    // Predicated region
    $region22: #{tpu_custom_call.1} parent=1 // pred_check
      _
    $region23: #{tpu_custom_call.1} parent=1 // pred_check_branch
      %406 = sbr.rel (0) target = $region25
    $region24: #{tpu_custom_call.1} parent=1 // pred_region
      %407 = dma.done [#allocation4], 256
    $region25: #{tpu_custom_call.1} parent=1 // pred_fallthru
      _
    %408 = vsyncpa [#allocation3], 1
    %409 = vsyncpa [#allocation6], 1
    %410 = vsyncpa [#allocation4], 1

</llo_original>
